<compile_context>
chip_gen: v5e
topology: v5e:2x2
jax: 0.10.0
libtpu: 0.0.40
codegen_flags: <defaults>
</compile_context>

<pallas_src>
import jax
import jax.numpy as jnp
from jax.experimental import pallas as pl
from jax.experimental.pallas import tpu as pltpu


HIDDEN = 32
LANES = 128


def _round_up(x, m):
    return ((x + m - 1) // m) * m


def _policy_kernel(xt_ref, w1t_ref, b1_ref, w2t_ref, b2_ref, wht_ref, bh_ref,
                   out_ref):
    # Feature-major torso: Linear -> ReLU -> Linear -> ReLU, batch on lanes.
    h1 = jnp.dot(w1t_ref[...], xt_ref[...],
                 preferred_element_type=jnp.float32)          # [32, TB] f32
    h1 = jnp.maximum(h1 + b1_ref[...], 0.0)
    h2 = jnp.dot(w2t_ref[...], h1.astype(w2t_ref.dtype),
                 preferred_element_type=jnp.float32)          # [32, TB] f32
    h2 = jnp.maximum(h2 + b2_ref[...], 0.0)
    # fused (policy ++ value) head -> one lane-dense [HEAD_ROWS, TB] f32 store
    out = jnp.dot(wht_ref[...], h2.astype(wht_ref.dtype),
                  preferred_element_type=jnp.float32)
    out_ref[...] = out + bh_ref[...]


def preprocess_params(params):
    """One-time parameter prep: transpose, zero-pad, bf16-cast. Cache the result."""
    (w1, b1, w2, b2, wp, bp, wv, bv) = params
    in_size = w1.shape[0]
    out_size = wp.shape[1]
    in_pad = _round_up(in_size, 8)
    head_rows = _round_up(out_size + 1, 8)

    w1t = jnp.zeros((HIDDEN, in_pad), jnp.float32).at[:, :in_size].set(w1.T)
    w2t = w2.T
    wht = jnp.zeros((head_rows, HIDDEN), jnp.float32)
    wht = wht.at[:out_size].set(wp.T).at[out_size].set(wv[:, 0])
    bht = jnp.zeros((head_rows, 1), jnp.float32)
    bht = bht.at[:out_size, 0].set(bp[0]).at[out_size, 0].set(bv[0, 0])

    return dict(
        w1t=w1t.astype(jnp.bfloat16),
        b1t=b1.reshape(HIDDEN, 1).astype(jnp.float32),
        w2t=w2t.astype(jnp.bfloat16),
        b2t=b2.reshape(HIDDEN, 1).astype(jnp.float32),
        wht=wht.astype(jnp.bfloat16),
        bht=bht,
        in_size=in_size, in_pad=in_pad,
        out_size=out_size, head_rows=head_rows,
    )


def categorical_mlp_policy_forward(x, prep, *, max_batch_tile=4096):
    """Returns (logits, values). `Categorical(logits=logits)` is implied by logits."""
    B = x.shape[0]
    in_size, in_pad = prep["in_size"], prep["in_pad"]
    out_size, head_rows = prep["out_size"], prep["head_rows"]

    # ---- batch tiling on the lane axis (multiples of 128, minimal padding) --
    min_padded = _round_up(B, LANES)
    n_tiles = pl.cdiv(min_padded, max_batch_tile)
    # v7x: guarantee >= 2 grid steps when the batch allows so both TCs get work.
    if n_tiles == 1 and min_padded >= 2 * LANES:
        n_tiles = 2
    tb = _round_up(pl.cdiv(min_padded, n_tiles), LANES)
    padded_b = tb * n_tiles
    grid = (n_tiles,)

    # ---- x -> bf16, feature-major [in_pad, padded_b] (wrapper-side layout) ---
    xt = x.astype(jnp.bfloat16).T
    if in_pad != in_size or padded_b != B:
        xt = jnp.pad(xt, ((0, in_pad - in_size), (0, padded_b - B)))

    # weights/biases stay VMEM-resident across all batch tiles
    resident = lambda shape: pl.BlockSpec(shape, lambda i: (0, 0))
    in_specs = [
        pl.BlockSpec((in_pad, tb), lambda i: (0, i)),             # x^T tile
        resident(prep["w1t"].shape), resident(prep["b1t"].shape),
        resident(prep["w2t"].shape), resident(prep["b2t"].shape),
        resident(prep["wht"].shape), resident(prep["bht"].shape),
    ]
    out_specs = pl.BlockSpec((head_rows, tb), lambda i: (0, i))

    # ---- VMEM budget: lane-padded blocks + temporaries + headroom -----------
    lane_pad = lambda n: _round_up(n, LANES)
    resident_bytes = 2 * (                                        # 2 bufs each
        HIDDEN * lane_pad(in_pad) * 2                             # w1t bf16
        + HIDDEN * lane_pad(HIDDEN) * 2                           # w2t bf16
        + head_rows * lane_pad(HIDDEN) * 2                        # wht bf16
        + (2 * HIDDEN + head_rows) * lane_pad(1) * 4)             # f32 biases
    tile_bytes = 2 * (in_pad * tb * 2) + 2 * (head_rows * tb * 4) # xT in, outT out
    temp_bytes = 2 * (HIDDEN * tb * 4) + 2 * (HIDDEN * tb * 2) + head_rows * tb * 4
    vmem_need = resident_bytes + tile_bytes + temp_bytes
    vmem_limit = int(min(max(2 * vmem_need, 8 << 20), 32 << 20))

    flops = 2 * padded_b * (in_pad * HIDDEN + HIDDEN * HIDDEN + HIDDEN * head_rows)
    w_bytes = ((prep["w1t"].size + prep["w2t"].size + prep["wht"].size) * 2
               + (prep["b1t"].size + prep["b2t"].size + prep["bht"].size) * 4)
    bytes_accessed = xt.size * 2 + w_bytes + padded_b * head_rows * 4
    cost = pl.CostEstimate(flops=flops, transcendentals=0,
                           bytes_accessed=bytes_accessed)

    # TODO(synk): if v7x profiling shows only one TensorCore busy with
    # "parallel", switch the batch axis to pltpu.CORE_PARALLEL.
    out_t = pl.pallas_call(
        _policy_kernel,
        out_shape=jax.ShapeDtypeStruct((head_rows, padded_b), jnp.float32),
        grid=grid,
        in_specs=in_specs,
        out_specs=out_specs,
        compiler_params=pltpu.CompilerParams(
            dimension_semantics=("parallel",),
            vmem_limit_bytes=vmem_limit,
        ),
        cost_estimate=cost,
    )(xt, prep["w1t"], prep["b1t"], prep["w2t"], prep["b2t"],
      prep["wht"], prep["bht"])

    logits = out_t[:out_size, :B].T
    values = out_t[out_size:out_size + 1, :B].T
    return logits, values


def init_params(key, input_size, output_size):
    """Deterministic init mirroring nn.Linear defaults (U(-1/sqrt(fan_in), +))."""
    def linear(k, fan_in, fan_out):
        kw, kb = jax.random.split(k)
        bound = 1.0 / jnp.sqrt(fan_in)
        w = jax.random.uniform(kw, (fan_in, fan_out), jnp.float32, -bound, bound)
        b = jax.random.uniform(kb, (1, fan_out), jnp.float32, -bound, bound)
        return w, b

    k1, k2, k3, k4 = jax.random.split(key, 4)
    w1, b1 = linear(k1, input_size, HIDDEN)
    w2, b2 = linear(k2, HIDDEN, HIDDEN)
    wp, bp = linear(k3, HIDDEN, output_size)
    wv, bv = linear(k4, HIDDEN, 1)
    return (w1, b1, w2, b2, wp, bp, wv, bv)


def reference_forward(x, params):
    (w1, b1, w2, b2, wp, bp, wv, bv) = params
    h = jnp.maximum(x @ w1 + b1, 0.0)
    h = jnp.maximum(h @ w2 + b2, 0.0)
    return h @ wp + bp, h @ wv + bv


if __name__ == "__main__":
    key = jax.random.PRNGKey(0)
    batch, input_size, output_size = 8, 16, 5

    kx, kp = jax.random.split(key)
    x = jax.random.normal(kx, (batch, input_size), jnp.float32)
    params = init_params(kp, input_size, output_size)

    # one-time parameter preprocessing (hoisted out of the per-call path)
    prep = preprocess_params(params)

    logits, values = categorical_mlp_policy_forward(x, prep)
    logits = jax.block_until_ready(logits)
    values = jax.block_until_ready(values)

    # correctness check against plain-JAX f32 reference (kernel uses bf16
    # inputs/weights with f32 accumulation -> loosened tolerance).
    ref_logits, ref_values = reference_forward(x, params)
    assert logits.shape == (batch, output_size) and values.shape == (batch, 1)
    assert jnp.allclose(logits, ref_logits, atol=5e-2, rtol=5e-2)
    assert jnp.allclose(values, ref_values, atol=5e-2, rtol=5e-2)

    # Categorical(logits=logits) -> probs, computed in glue (the distribution
    # object has no kernel-side representation).
    probs = jax.nn.softmax(logits, axis=-1)
    assert probs.shape == (batch, output_size)

    print("KERNEL_OK")
</pallas_src>

<mosaic_0001>
module attributes {stable_mosaic.version = 11 : i64} {
  func.func @_policy_kernel(%arg0: i32, %arg1: memref<16x128xbf16, #tpu.memory_space<vmem>>, %arg2: memref<32x16xbf16, #tpu.memory_space<vmem>>, %arg3: memref<32x1xf32, #tpu.memory_space<vmem>>, %arg4: memref<32x32xbf16, #tpu.memory_space<vmem>>, %arg5: memref<32x1xf32, #tpu.memory_space<vmem>>, %arg6: memref<8x32xbf16, #tpu.memory_space<vmem>>, %arg7: memref<8x1xf32, #tpu.memory_space<vmem>>, %arg8: memref<8x128xf32, #tpu.memory_space<vmem>>) attributes {dimension_semantics = [#tpu.dimension_semantics<parallel>], iteration_bounds = array<i64: 1>, scalar_prefetch = 0 : i64, scratch_operands = 0 : i64, tpu.core_type = #tpu.core_type<tc>, window_params = [{transform_indices = @transform_0, window_bounds = array<i64: 16, 128>}, {pipeline_mode = #tpu.pipeline_mode<synchronous>, transform_indices = @transform_1, window_bounds = array<i64: 32, 16>}, {pipeline_mode = #tpu.pipeline_mode<synchronous>, transform_indices = @transform_2, window_bounds = array<i64: 32, 1>}, {pipeline_mode = #tpu.pipeline_mode<synchronous>, transform_indices = @transform_3, window_bounds = array<i64: 32, 32>}, {pipeline_mode = #tpu.pipeline_mode<synchronous>, transform_indices = @transform_4, window_bounds = array<i64: 32, 1>}, {pipeline_mode = #tpu.pipeline_mode<synchronous>, transform_indices = @transform_5, window_bounds = array<i64: 8, 32>}, {pipeline_mode = #tpu.pipeline_mode<synchronous>, transform_indices = @transform_6, window_bounds = array<i64: 8, 1>}, {transform_indices = @transform_7, window_bounds = array<i64: 8, 128>}]} {
    %c0 = arith.constant 0 : index
    %c0_0 = arith.constant 0 : index
    %0 = vector.load %arg2[%c0, %c0_0] : memref<32x16xbf16, #tpu.memory_space<vmem>>, vector<32x16xbf16>
    %c0_1 = arith.constant 0 : index
    %c0_2 = arith.constant 0 : index
    %1 = vector.load %arg1[%c0_1, %c0_2] : memref<16x128xbf16, #tpu.memory_space<vmem>>, vector<16x128xbf16>
    %cst = arith.constant dense<0.000000e+00> : vector<32x128xf32>
    %2 = tpu.matmul %0, %1, %cst {dimension_numbers = #tpu.dot_dimension_numbers<[1], [0], [0], [1], [0, 0, 1, 1], [], []>} : vector<32x16xbf16>, vector<16x128xbf16>, vector<32x128xf32> -> vector<32x128xf32>
    %c0_3 = arith.constant 0 : index
    %c0_4 = arith.constant 0 : index
    %3 = vector.load %arg3[%c0_3, %c0_4] : memref<32x1xf32, #tpu.memory_space<vmem>>, vector<32x1xf32>
    %4 = vector.broadcast %3 : vector<32x1xf32> to vector<32x128xf32>
    %5 = arith.addf %2, %4 : vector<32x128xf32>
    %cst_5 = arith.constant 0.000000e+00 : f32
    %6 = vector.broadcast %cst_5 : f32 to vector<32x128xf32>
    %7 = arith.maximumf %5, %6 : vector<32x128xf32>
    %c0_6 = arith.constant 0 : index
    %c0_7 = arith.constant 0 : index
    %8 = vector.load %arg4[%c0_6, %c0_7] : memref<32x32xbf16, #tpu.memory_space<vmem>>, vector<32x32xbf16>
    %9 = arith.truncf %7 : vector<32x128xf32> to vector<32x128xbf16>
    %cst_8 = arith.constant dense<0.000000e+00> : vector<32x128xf32>
    %10 = tpu.matmul %8, %9, %cst_8 {dimension_numbers = #tpu.dot_dimension_numbers<[1], [0], [0], [1], [0, 0, 1, 1], [], []>} : vector<32x32xbf16>, vector<32x128xbf16>, vector<32x128xf32> -> vector<32x128xf32>
    %c0_9 = arith.constant 0 : index
    %c0_10 = arith.constant 0 : index
    %11 = vector.load %arg5[%c0_9, %c0_10] : memref<32x1xf32, #tpu.memory_space<vmem>>, vector<32x1xf32>
    %12 = vector.broadcast %11 : vector<32x1xf32> to vector<32x128xf32>
    %13 = arith.addf %10, %12 : vector<32x128xf32>
    %cst_11 = arith.constant 0.000000e+00 : f32
    %14 = vector.broadcast %cst_11 : f32 to vector<32x128xf32>
    %15 = arith.maximumf %13, %14 : vector<32x128xf32>
    %c0_12 = arith.constant 0 : index
    %c0_13 = arith.constant 0 : index
    %16 = vector.load %arg6[%c0_12, %c0_13] : memref<8x32xbf16, #tpu.memory_space<vmem>>, vector<8x32xbf16>
    %17 = arith.truncf %15 : vector<32x128xf32> to vector<32x128xbf16>
    %cst_14 = arith.constant dense<0.000000e+00> : vector<8x128xf32>
    %18 = tpu.matmul %16, %17, %cst_14 {dimension_numbers = #tpu.dot_dimension_numbers<[1], [0], [0], [1], [0, 0, 1, 1], [], []>} : vector<8x32xbf16>, vector<32x128xbf16>, vector<8x128xf32> -> vector<8x128xf32>
    %c0_15 = arith.constant 0 : index
    %c0_16 = arith.constant 0 : index
    %19 = vector.load %arg7[%c0_15, %c0_16] : memref<8x1xf32, #tpu.memory_space<vmem>>, vector<8x1xf32>
    %20 = vector.broadcast %19 : vector<8x1xf32> to vector<8x128xf32>
    %21 = arith.addf %18, %20 : vector<8x128xf32>
    %c0_17 = arith.constant 0 : index
    %c0_18 = arith.constant 0 : index
    %22 = vector.load %arg8[%c0_17, %c0_18] : memref<8x128xf32, #tpu.memory_space<vmem>>, vector<8x128xf32>
    tpu.vector_store %arg8[%c0_17, %c0_18], %21 {strides = array<i32>} : memref<8x128xf32, #tpu.memory_space<vmem>>, vector<8x128xf32>,
    return
  }
  func.func @transform_0(%arg0: i32) -> (i32, i32) {
    %c0_i32 = arith.constant 0 : i32
    %c0_i32_0 = arith.constant 0 : i32
    return %c0_i32, %arg0 : i32, i32
  }
  func.func @transform_1(%arg0: i32) -> (i32, i32) {
    %c0_i32 = arith.constant 0 : i32
    %c0_i32_0 = arith.constant 0 : i32
    %c0_i32_1 = arith.constant 0 : i32
    return %c0_i32, %c0_i32_0 : i32, i32
  }
  func.func @transform_2(%arg0: i32) -> (i32, i32) {
    %c0_i32 = arith.constant 0 : i32
    %c0_i32_0 = arith.constant 0 : i32
    %c0_i32_1 = arith.constant 0 : i32
    return %c0_i32, %c0_i32_0 : i32, i32
  }
  func.func @transform_3(%arg0: i32) -> (i32, i32) {
    %c0_i32 = arith.constant 0 : i32
    %c0_i32_0 = arith.constant 0 : i32
    %c0_i32_1 = arith.constant 0 : i32
    return %c0_i32, %c0_i32_0 : i32, i32
  }
  func.func @transform_4(%arg0: i32) -> (i32, i32) {
    %c0_i32 = arith.constant 0 : i32
    %c0_i32_0 = arith.constant 0 : i32
    %c0_i32_1 = arith.constant 0 : i32
    return %c0_i32, %c0_i32_0 : i32, i32
  }
  func.func @transform_5(%arg0: i32) -> (i32, i32) {
    %c0_i32 = arith.constant 0 : i32
    %c0_i32_0 = arith.constant 0 : i32
    %c0_i32_1 = arith.constant 0 : i32
    return %c0_i32, %c0_i32_0 : i32, i32
  }
  func.func @transform_6(%arg0: i32) -> (i32, i32) {
    %c0_i32 = arith.constant 0 : i32
    %c0_i32_0 = arith.constant 0 : i32
    %c0_i32_1 = arith.constant 0 : i32
    return %c0_i32, %c0_i32_0 : i32, i32
  }
  func.func @transform_7(%arg0: i32) -> (i32, i32) {
    %c0_i32 = arith.constant 0 : i32
    %c0_i32_0 = arith.constant 0 : i32
    return %c0_i32, %arg0 : i32, i32
  }
}

</mosaic_0001>

<llo_original>
// kernel: tpu_custom_call.1
$region0: #{tpu_custom_call.1}
  #allocation0 [shape = 'u32[]', space=smem, size = 0x4, offset = 0x4, fixed_abs, tag = 'smem constant byte address 0x4 - core index']
  #allocation1 [shape = 'u32[72,128]{1,0:T(1,128)}', space=vmem, size = 0x9000, scoped, tag = 'internal scratch']
  %s0 = inlined_call_operand.vmem [shape: bf16[16,128], index: 0, kind: input, shape index: {}]
  %s1 = inlined_call_operand.vmem [shape: bf16[32,16], index: 1, kind: input, shape index: {}]
  %s2 = inlined_call_operand.vmem [shape: f32[32,1], index: 2, kind: input, shape index: {}]
  %s3 = inlined_call_operand.vmem [shape: bf16[32,32], index: 3, kind: input, shape index: {}]
  %s4 = inlined_call_operand.vmem [shape: f32[32,1], index: 4, kind: input, shape index: {}]
  %s5 = inlined_call_operand.vmem [shape: bf16[8,32], index: 5, kind: input, shape index: {}]
  %s6 = inlined_call_operand.vmem [shape: f32[8,1], index: 6, kind: input, shape index: {}]
  %s7 = inlined_call_operand.hbm [shape: f32[8,128], index: 7, kind: output, shape index: {}]
  %s8 = sld [smem:[#allocation0]]
  $region38: #{tpu_custom_call.1} parent=0
    _
  %s10 = ssub.s32 1, %s8
  %s11 = scalar_select 0, %s10, %s8
  $region1: #{tpu_custom_call.1} parent=0
    #allocation2 [shape = 'u8[4096]{0}', space=vmem, size = 0x1000, scoped, tag = 'output window, operand 0, single buffered']
    #allocation3 [shape = 's32[1]{0}', space=sflag, size = 0x4, scoped, tag = 'scoped memory for tpu_custom_call.1']
    %12 = vsyncpa [#allocation3], 0
    // Predicated region
    $region2: #{tpu_custom_call.1} parent=1 // pred_check
      _
    $region3: #{tpu_custom_call.1} parent=1 // pred_check_branch
      %14 = sbr.rel (0) target = $region5
    $region4: #{tpu_custom_call.1} parent=1 // pred_region
      _
    $region5: #{tpu_custom_call.1} parent=1 // pred_fallthru
      _
    // Predicated region
    $region6: #{tpu_custom_call.1} parent=1 // pred_check
      _
    $region7: #{tpu_custom_call.1} parent=1 // pred_check_branch
      %16 = sbr.rel (0) target = $region9
    $region8: #{tpu_custom_call.1} parent=1 // pred_region
      _
    $region9: #{tpu_custom_call.1} parent=1 // pred_fallthru
      _
    // Predicated region
    $region10: #{tpu_custom_call.1} parent=1 // pred_check
      _
    $region11: #{tpu_custom_call.1} parent=1 // pred_check_branch
      %18 = sbr.rel (0) target = $region13
    $region12: #{tpu_custom_call.1} parent=1 // pred_region
      _
    $region13: #{tpu_custom_call.1} parent=1 // pred_fallthru
      _
    // Predicated region
    $region14: #{tpu_custom_call.1} parent=1 // pred_check
      _
    $region15: #{tpu_custom_call.1} parent=1 // pred_check_branch
      %20 = sbr.rel (0) target = $region17
    $region16: #{tpu_custom_call.1} parent=1 // pred_region
      _
    $region17: #{tpu_custom_call.1} parent=1 // pred_fallthru
      _
    // Predicated region
    $region18: #{tpu_custom_call.1} parent=1 // pred_check
      _
    $region19: #{tpu_custom_call.1} parent=1 // pred_check_branch
      %22 = sbr.rel (0) target = $region21
    $region20: #{tpu_custom_call.1} parent=1 // pred_region
      _
    $region21: #{tpu_custom_call.1} parent=1 // pred_fallthru
      _
    // Predicated region
    $region22: #{tpu_custom_call.1} parent=1 // pred_check
      _
    $region23: #{tpu_custom_call.1} parent=1 // pred_check_branch
      %24 = sbr.rel (0) target = $region25
    $region24: #{tpu_custom_call.1} parent=1 // pred_region
      _
    $region25: #{tpu_custom_call.1} parent=1 // pred_fallthru
      _
    // Predicated region
    $region26: #{tpu_custom_call.1} parent=1 // pred_check
      _
    $region27: #{tpu_custom_call.1} parent=1 // pred_check_branch
      %26 = sbr.rel (0) target = $region29
    $region28: #{tpu_custom_call.1} parent=1 // pred_region
      _
    $region29: #{tpu_custom_call.1} parent=1 // pred_fallthru
      _
    %v28 = vld [vmem:[%s1] sm:$0xf]
    %v29 = vld [vmem:[%s1 + $0x4] sm:$0xf]
    %v30 = vld [vmem:[%s1 + $0x8] sm:$0xf]
    %v31 = vld [vmem:[%s1 + $0xc] sm:$0xf]
    %v32 = vld [vmem:[%s0] sm:$0xf]
    %v33 = vld [vmem:[%s0 + $0x4] sm:$0xf]
    %v34 = vld [vmem:[%s2] sm:$0xff]
    %v35 = vld [vmem:[%s2 + $0x8] sm:$0xff]
    %v36 = vld [vmem:[%s2 + $0x10] sm:$0xff]
    %v37 = vld [vmem:[%s2 + $0x18] sm:$0xff]
    %39 = vset.pattern.permute.xlu0 0
    %40 = vperm.xlu0 %39, %v34
    %v41 = vpop.permute.xlu0 %40
    %44 = vset.pattern.permute.xlu0 0
    %45 = vperm.xlu0 %44, %v35
    %v46 = vpop.permute.xlu0 %45
    %49 = vset.pattern.permute.xlu0 0
    %50 = vperm.xlu0 %49, %v36
    %v51 = vpop.permute.xlu0 %50
    %54 = vset.pattern.permute.xlu0 0
    %55 = vperm.xlu0 %54, %v37
    %v56 = vpop.permute.xlu0 %55
    %v62 = vunpack.c.l.b16 %v28
    %v63 = vunpack.c.l.b16 %v29
    %v64 = vunpack.c.l.b16 %v30
    %v65 = vunpack.c.l.b16 %v31
    %v66 = vpack.c.b16 %v63, %v62
    %v67 = vpack.c.b16 %v65, %v64
    %v70 = vunpack.c.l.b16 %v32
    %v71 = vunpack.c.l.b16 %v33
    %v72 = vpack.c.b16 %v71, %v70
    %vm74 = vcmask 130048
    %v76 = vsel %vm74, %v66, 0
    %v79 = vsel %vm74, %v67, 0
    %81 = vmatpush.bf16.msra.mxu0 0
    %82 = vmatpush.bf16.msra.mxu0 0
    %83 = vmatpush.bf16.msra.mxu0 0
    %84 = vmatpush.bf16.msra.mxu0 0
    %85 = vmatpush.bf16.msra.mxu0 0
    %86 = vmatpush.bf16.msra.mxu0 0
    %87 = vmatpush.bf16.msra.mxu0 0
    %88 = vmatpush.bf16.msra.mxu0 %v72
    %89 = vmatmul.bf16.gmra.mxu0 %v76
    %v90 = vpop.f32.mrf.mxu0
    %v91 = vadd.f32 %v41, %v90
    %v92 = vpop.f32.mrf.mxu0
    %v93 = vadd.f32 %v46, %v92
    %94 = vmatmul.bf16.gmra.mxu0 %v79
    %v95 = vpop.f32.mrf.mxu0
    %v96 = vadd.f32 %v51, %v95
    %v97 = vpop.f32.mrf.mxu0
    %v98 = vadd.f32 %v56, %v97
    %99 = vdwg.mxu0
    %v100 = vmax.f32 %v91, 0.0
    %v101 = vmax.f32 %v93, 0.0
    %v102 = vmax.f32 %v96, 0.0
    %v103 = vmax.f32 %v98, 0.0
    %v104 = vld [vmem:[%s3] sm:$0xf]
    %v105 = vld [vmem:[%s3 + $0x4] sm:$0xf]
    %v106 = vld [vmem:[%s3 + $0x8] sm:$0xf]
    %v107 = vld [vmem:[%s3 + $0xc] sm:$0xf]
    %v108 = vpack.c.bf16 %v101, %v100
    %v109 = vpack.c.bf16 %v103, %v102
    %v110 = vld [vmem:[%s4] sm:$0xff]
    %v111 = vld [vmem:[%s4 + $0x8] sm:$0xff]
    %v112 = vld [vmem:[%s4 + $0x10] sm:$0xff]
    %v113 = vld [vmem:[%s4 + $0x18] sm:$0xff]
    %115 = vset.pattern.permute.xlu0 0
    %116 = vperm.xlu0 %115, %v110
    %v117 = vpop.permute.xlu0 %116
    %120 = vset.pattern.permute.xlu0 0
    %121 = vperm.xlu0 %120, %v111
    %v122 = vpop.permute.xlu0 %121
    %125 = vset.pattern.permute.xlu0 0
    %126 = vperm.xlu0 %125, %v112
    %v127 = vpop.permute.xlu0 %126
    %130 = vset.pattern.permute.xlu0 0
    %131 = vperm.xlu0 %130, %v113
    %v132 = vpop.permute.xlu0 %131
    %v138 = vunpack.c.l.b16 %v104
    %v139 = vunpack.c.l.b16 %v105
    %v140 = vunpack.c.l.b16 %v106
    %v141 = vunpack.c.l.b16 %v107
    %v142 = vpack.c.b16 %v139, %v138
    %v143 = vpack.c.b16 %v141, %v140
    %vm144 = vcmask 261120
    %v146 = vsel %vm144, %v142, 0
    %v149 = vsel %vm144, %v143, 0
    %151 = vmatpush.bf16.msra.mxu0 0
    %152 = vmatpush.bf16.msra.mxu0 0
    %153 = vmatpush.bf16.msra.mxu0 0
    %154 = vmatpush.bf16.msra.mxu0 0
    %155 = vmatpush.bf16.msra.mxu0 0
    %156 = vmatpush.bf16.msra.mxu0 0
    %157 = vmatpush.bf16.msra.mxu0 %v109
    %158 = vmatpush.bf16.msra.mxu0 %v108
    %159 = vmatmul.bf16.gmra.mxu0 %v146
    %v160 = vpop.f32.mrf.mxu0
    %v161 = vadd.f32 %v117, %v160
    %v162 = vpop.f32.mrf.mxu0
    %v163 = vadd.f32 %v122, %v162
    %164 = vmatmul.bf16.gmra.mxu0 %v149
    %v165 = vpop.f32.mrf.mxu0
    %v166 = vadd.f32 %v127, %v165
    %v167 = vpop.f32.mrf.mxu0
    %v168 = vadd.f32 %v132, %v167
    %169 = vdwg.mxu0
    %v170 = vmax.f32 %v161, 0.0
    %v171 = vmax.f32 %v163, 0.0
    %v172 = vmax.f32 %v166, 0.0
    %v173 = vmax.f32 %v168, 0.0
    %v174 = vld [vmem:[%s5] sm:$0xf]
    %v175 = vpack.c.bf16 %v171, %v170
    %v176 = vpack.c.bf16 %v173, %v172
    %v177 = vld [vmem:[%s6] sm:$0xff]
    %179 = vset.pattern.permute.xlu0 0
    %180 = vperm.xlu0 %179, %v177
    %v181 = vpop.permute.xlu0 %180
    %v184 = vsel %vm144, %v174, 0
    %186 = vmatpush.bf16.msra.mxu0 0
    %187 = vmatpush.bf16.msra.mxu0 0
    %188 = vmatpush.bf16.msra.mxu0 0
    %189 = vmatpush.bf16.msra.mxu0 0
    %190 = vmatpush.bf16.msra.mxu0 0
    %191 = vmatpush.bf16.msra.mxu0 0
    %192 = vmatpush.bf16.msra.mxu0 %v176
    %193 = vmatpush.bf16.msra.mxu0 %v175
    %194 = vmatmul.bf16.gmra.mxu0 %v184
    %v195 = vpop.f32.mrf.mxu0
    %v196 = vadd.f32 %v181, %v195
    %v197 = vpop.f32.mrf.mxu0
    %198 = vdwg.mxu0
    %199 = vst [vmem:[#allocation2] sm:$0xff] %v196
    // Predicated region
    $region30: #{tpu_custom_call.1} parent=1 // pred_check
      _
    $region31: #{tpu_custom_call.1} parent=1 // pred_check_branch
      %201 = sbr.rel (0) target = $region33
    $region32: #{tpu_custom_call.1} parent=1 // pred_region
      %203 = vsyncadd [#allocation3], 0
      %s205 = sshll.u32 [#allocation2], 4
      %s206 = int_to_ptr.vmem [resolvable:$true] %s205
      %s207 = sshll.u32 %s7, 4
      %s208 = int_to_ptr.hbm [resolvable:$true] %s207
      %210 = dma.vmem_to_hbm [thread:$0]  %s206, 128, %s208, [#allocation3]
    $region33: #{tpu_custom_call.1} parent=1 // pred_fallthru
      _
    // Predicated region
    $region34: #{tpu_custom_call.1} parent=1 // pred_check
      _
    $region35: #{tpu_custom_call.1} parent=1 // pred_check_branch
      %212 = sbr.rel (0) target = $region37
    $region36: #{tpu_custom_call.1} parent=1 // pred_region
      %214 = dma.done [#allocation3], 128
    $region37: #{tpu_custom_call.1} parent=1 // pred_fallthru
      _
    %215 = vsyncpa [#allocation3], 1

</llo_original>
